<compile_context>
chip_gen: v6e
topology: v6e:2x2x1
jax: 0.10.0
libtpu: 0.0.40
codegen_flags: <defaults>
</compile_context>

<pallas_src>
import functools

import jax
import jax.numpy as jnp
from jax import lax
from jax.experimental import pallas as pl
from jax.experimental.pallas import tpu as pltpu


def _roll_left_store(dst_ref, x, t):
    """dst[c, i] = x[c, (i + t) % L], using only static slices and stores."""
    L = x.shape[-1]
    t = t % L
    if t == 0:
        dst_ref[...] = x
    else:
        dst_ref[:, : L - t] = x[:, t:]
        dst_ref[:, L - t:] = x[:, :t]


def _corr_kernel(f1_ref, f2_ref, maskh_ref, maskw_ref, out_ref, slab_ref,
                 *, C, H, W, D, pad):
    # f1_ref    : (1, C, L)      features1, flattened spatially (L = H*W, lanes)
    # f2_ref    : (1, C, L)      features2, flattened, UNPADDED
    # maskh_ref : (1, 1, L)      vertical border mask row for the current dy
    # maskw_ref : (D, L)         horizontal border masks for all dx
    # out_ref   : (1, 1, D, L)   all dx results for the current (b, dy)
    # slab_ref  : (C, L) VMEM    f2 rolled left by offset(dy, dx), carried across steps
    L = H * W
    dy = pl.program_id(1)

    # offset(dy, dx) = (dy - pad) * W + (dx - pad).  At dy == 0 (start of a batch)
    # initialise the slab to offset(0, 0); afterwards it is advanced incrementally.
    @pl.when(dy == 0)
    def _init():
        f2 = f2_ref[0].astype(jnp.float32)               # (C, L)
        _roll_left_store(slab_ref, f2, -(pad * W + pad))

    f1 = f1_ref[0].astype(jnp.float32)                   # (C, L)
    row_ids = lax.broadcasted_iota(jnp.int32, (D, L), 0)

    def dx_body(dx, block):
        x = slab_ref[...]                                # (C, L), offset(dy, dx)
        corr = jnp.sum(f1 * x, axis=0, keepdims=True)    # (1, L)  channel reduction
        block = jnp.where(row_ids == dx, corr, block)    # place row dx
        _roll_left_store(slab_ref, x, 1)                 # advance to offset(dy, dx+1)
        return block

    block = lax.fori_loop(0, D, dx_body, jnp.zeros((D, L), jnp.float32))

    # Zero out contributions that came from outside the (implicit zero) padding
    # region and apply 1/C for the channel mean once, at the end.
    scale = maskh_ref[0] * maskw_ref[...] * jnp.float32(1.0 / C)   # (D, L)
    out_ref[0, 0] = (block * scale).astype(out_ref.dtype)

    # Advance slab from offset(dy, 0) + D to offset(dy + 1, 0) for the next step.
    x = slab_ref[...]
    _roll_left_store(slab_ref, x, W - D)


def correlation_layer(features1, features2, pad_size=4, max_displacement=4):
    """Pallas equivalent of ezflow CorrelationLayer.forward."""
    if features1.shape != features2.shape:
        raise ValueError("features1 and features2 must have the same shape")
    if pad_size < max_displacement:
        raise ValueError("pad_size must be >= max_displacement")

    B, C, H, W = features1.shape
    D = 2 * max_displacement + 1
    L = H * W

    f1 = features1.reshape(B, C, L)
    f2 = features2.reshape(B, C, L)

    # Border masks: keep (h, w) for displacement d iff the padded read was in-range.
    d = jnp.arange(D)[:, None]
    h = jnp.arange(H)[None, :]
    w = jnp.arange(W)[None, :]
    mh = ((h + d >= pad_size) & (h + d < H + pad_size)).astype(jnp.float32)   # (D, H)
    mw = ((w + d >= pad_size) & (w + d < W + pad_size)).astype(jnp.float32)   # (D, W)
    maskh = jnp.broadcast_to(mh[:, :, None], (D, H, W)).reshape(D, 1, L)
    maskw = jnp.broadcast_to(mw[:, None, :], (D, H, W)).reshape(D, L)

    kernel = functools.partial(_corr_kernel, C=C, H=H, W=W, D=D, pad=pad_size)

    # Explicit scoped-VMEM budget (double-buffered blocks + scratch), clamped to
    # stay under every generation's physical VMEM.
    vmem_need = 4 * (4 * C * L + 3 * D * L + 4 * L + C * L) + (2 << 20)
    vmem_limit = int(min(max(vmem_need, 16 * 2 ** 20), 64 * 2 ** 20))

    out_flat = pl.pallas_call(
        kernel,
        out_shape=jax.ShapeDtypeStruct((B, D, D, L), features1.dtype),
        grid_spec=pltpu.PrefetchScalarGridSpec(
            num_scalar_prefetch=0,
            grid=(B, D),                                   # dy is the inner (fast) axis
            in_specs=[
                pl.BlockSpec((1, C, L), lambda b, dy: (b, 0, 0)),     # f1 (resident per b)
                pl.BlockSpec((1, C, L), lambda b, dy: (b, 0, 0)),     # f2 (resident per b)
                pl.BlockSpec((1, 1, L), lambda b, dy: (dy, 0, 0)),    # maskh row for dy
                pl.BlockSpec((D, L), lambda b, dy: (0, 0)),           # maskw (resident)
            ],
            out_specs=pl.BlockSpec((1, 1, D, L), lambda b, dy: (b, dy, 0, 0)),
            scratch_shapes=[pltpu.VMEM((C, L), jnp.float32)],
        ),
        compiler_params=pltpu.CompilerParams(
            # dy carries the slab scratch -> must stay sequential ("arbitrary").
            dimension_semantics=("parallel", "arbitrary"),
            vmem_limit_bytes=vmem_limit,
        ),
    )(f1, f2, maskh, maskw)

    # Kernel output is lane-dense (B, D, D, H*W); restore PyTorch layout.
    return out_flat.reshape(B, D * D, H, W)


def _reference(features1, features2, pad_size=4, max_displacement=4):
    """Pure-JAX reference mirroring the PyTorch loop exactly."""
    B, C, H, W = features1.shape
    D = 2 * max_displacement + 1
    f2_pad = jnp.pad(
        features2,
        ((0, 0), (0, 0), (pad_size, pad_size), (pad_size, pad_size)),
    )
    outs = []
    for dy in range(D):
        for dx in range(D):
            win = f2_pad[:, :, dy:dy + H, dx:dx + W]
            outs.append(jnp.mean(features1 * win, axis=1, keepdims=True))
    return jnp.concatenate(outs, axis=1)


if __name__ == "__main__":
    key = jax.random.PRNGKey(0)
    k1, k2 = jax.random.split(key)

    B, C, H, W = 2, 4, 16, 16
    pad_size, max_displacement = 4, 4

    features1 = jax.random.normal(k1, (B, C, H, W), dtype=jnp.float32)
    features2 = jax.random.normal(k2, (B, C, H, W), dtype=jnp.float32)

    out = correlation_layer(features1, features2, pad_size, max_displacement)
    out = jax.block_until_ready(out)

    D = 2 * max_displacement + 1
    assert out.shape == (B, D * D, H, W), out.shape

    ref = _reference(features1, features2, pad_size, max_displacement)
    assert jnp.allclose(out, ref, atol=1e-5, rtol=1e-5), "mismatch vs reference"

    print("KERNEL_OK")
</pallas_src>

<mosaic_0001>
module attributes {stable_mosaic.version = 11 : i64} {
  func.func @_corr_kernel(%arg0: i32, %arg1: i32, %arg2: memref<1x4x256xf32, #tpu.memory_space<vmem>>, %arg3: memref<1x4x256xf32, #tpu.memory_space<vmem>>, %arg4: memref<1x1x256xf32, #tpu.memory_space<vmem>>, %arg5: memref<9x256xf32, #tpu.memory_space<vmem>>, %arg6: memref<1x1x9x256xf32, #tpu.memory_space<vmem>>, %arg7: memref<4x256xf32, #tpu.memory_space<vmem>>) attributes {dimension_semantics = [#tpu.dimension_semantics<parallel>, #tpu.dimension_semantics<arbitrary>], iteration_bounds = array<i64: 2, 9>, scalar_prefetch = 0 : i64, scratch_operands = 1 : i64, tpu.core_type = #tpu.core_type<tc>, window_params = [{transform_indices = @transform_0, window_bounds = array<i64: 1, 4, 256>}, {transform_indices = @transform_1, window_bounds = array<i64: 1, 4, 256>}, {transform_indices = @transform_2, window_bounds = array<i64: 1, 1, 256>}, {pipeline_mode = #tpu.pipeline_mode<synchronous>, transform_indices = @transform_3, window_bounds = array<i64: 9, 256>}, {transform_indices = @transform_4, window_bounds = array<i64: 1, 1, 9, 256>}]} {
    %c0_i32 = arith.constant 0 : i32
    %0 = arith.cmpi eq, %arg1, %c0_i32 : i32
    %1 = arith.extui %0 : i1 to i32
    %c0_i32_0 = arith.constant 0 : i32
    %2 = arith.cmpi ne, %1, %c0_i32_0 : i32
    scf.if %2 {
      %c0_20 = arith.constant 0 : index
      %c0_21 = arith.constant 0 : index
      %c0_22 = arith.constant 0 : index
      %25 = vector.load %arg3[%c0_20, %c0_21, %c0_22] : memref<1x4x256xf32, #tpu.memory_space<vmem>>, vector<1x4x256xf32>
      %26 = vector.shape_cast %25 : vector<1x4x256xf32> to vector<4x256xf32>
      %27 = vector.extract_strided_slice %26 {offsets = [0, 188], sizes = [4, 68], strides = [1, 1]} : vector<4x256xf32> to vector<4x68xf32>
      %c0_23 = arith.constant 0 : index
      %c0_24 = arith.constant 0 : index
      %28 = vector.load %arg7[%c0_23, %c0_24] : memref<4x256xf32, #tpu.memory_space<vmem>>, vector<4x68xf32>
      tpu.vector_store %arg7[%c0_23, %c0_24], %27 {strides = array<i32>} : memref<4x256xf32, #tpu.memory_space<vmem>>, vector<4x68xf32>,
      %29 = vector.extract_strided_slice %26 {offsets = [0, 0], sizes = [4, 188], strides = [1, 1]} : vector<4x256xf32> to vector<4x188xf32>
      %c0_25 = arith.constant 0 : index
      %c68 = arith.constant 68 : index
      %30 = vector.load %arg7[%c0_25, %c68] : memref<4x256xf32, #tpu.memory_space<vmem>>, vector<4x188xf32>
      tpu.vector_store %arg7[%c0_25, %c68], %29 {strides = array<i32>} : memref<4x256xf32, #tpu.memory_space<vmem>>, vector<4x188xf32>,
    } else {
    }
    %c0 = arith.constant 0 : index
    %c0_1 = arith.constant 0 : index
    %c0_2 = arith.constant 0 : index
    %3 = vector.load %arg2[%c0, %c0_1, %c0_2] : memref<1x4x256xf32, #tpu.memory_space<vmem>>, vector<1x4x256xf32>
    %4 = vector.shape_cast %3 : vector<1x4x256xf32> to vector<4x256xf32>
    %5 = tpu.iota {dimensions = array<i32: 0>} : vector<9x256xi32>
    %cst = arith.constant 0.000000e+00 : f32
    %6 = vector.broadcast %cst : f32 to vector<9x256xf32>
    %c0_i32_3 = arith.constant 0 : i32
    %c9_i32 = arith.constant 9 : i32
    %7 = arith.addi %c0_i32_3, %c9_i32 : i32
    %c1_i32 = arith.constant 1 : i32
    %8 = scf.for %arg8 = %c0_i32_3 to %7 step %c1_i32 iter_args(%arg9 = %6) -> (vector<9x256xf32>)  : i32 {
      %c0_20 = arith.constant 0 : index
      %c0_21 = arith.constant 0 : index
      %25 = vector.load %arg7[%c0_20, %c0_21] : memref<4x256xf32, #tpu.memory_space<vmem>>, vector<4x256xf32>
      %26 = arith.mulf %4, %25 : vector<4x256xf32>
      %cst_22 = arith.constant dense<0.000000e+00> : vector<256xf32>
      %27 = vector.multi_reduction <add>, %26, %cst_22 [0] : vector<4x256xf32> to vector<256xf32>
      %28 = vector.shape_cast %27 : vector<256xf32> to vector<1x256xf32>
      %29 = vector.broadcast %arg8 : i32 to vector<9x256xi32>
      %30 = arith.cmpi eq, %5, %29 : vector<9x256xi32>
      %31 = vector.shape_cast %28 : vector<1x256xf32> to vector<1x256xf32>
      %32 = vector.broadcast %31 : vector<1x256xf32> to vector<9x256xf32>
      %33 = arith.select %30, %32, %arg9 : vector<9x256xi1>, vector<9x256xf32>
      %34 = vector.extract_strided_slice %25 {offsets = [0, 1], sizes = [4, 255], strides = [1, 1]} : vector<4x256xf32> to vector<4x255xf32>
      %c0_23 = arith.constant 0 : index
      %c0_24 = arith.constant 0 : index
      %35 = vector.load %arg7[%c0_23, %c0_24] : memref<4x256xf32, #tpu.memory_space<vmem>>, vector<4x255xf32>
      tpu.vector_store %arg7[%c0_23, %c0_24], %34 {strides = array<i32>} : memref<4x256xf32, #tpu.memory_space<vmem>>, vector<4x255xf32>,
      %36 = vector.extract_strided_slice %25 {offsets = [0, 0], sizes = [4, 1], strides = [1, 1]} : vector<4x256xf32> to vector<4x1xf32>
      %c0_25 = arith.constant 0 : index
      %c255 = arith.constant 255 : index
      %37 = vector.load %arg7[%c0_25, %c255] : memref<4x256xf32, #tpu.memory_space<vmem>>, vector<4x1xf32>
      tpu.vector_store %arg7[%c0_25, %c255], %36 {strides = array<i32>} : memref<4x256xf32, #tpu.memory_space<vmem>>, vector<4x1xf32>,
      scf.yield %33 : vector<9x256xf32>
    }
    %c9_i32_4 = arith.constant 9 : i32
    %c0_5 = arith.constant 0 : index
    %c0_6 = arith.constant 0 : index
    %c0_7 = arith.constant 0 : index
    %9 = vector.load %arg4[%c0_5, %c0_6, %c0_7] : memref<1x1x256xf32, #tpu.memory_space<vmem>>, vector<1x1x256xf32>
    %10 = vector.shape_cast %9 : vector<1x1x256xf32> to vector<1x256xf32>
    %c0_8 = arith.constant 0 : index
    %c0_9 = arith.constant 0 : index
    %11 = vector.load %arg5[%c0_8, %c0_9] : memref<9x256xf32, #tpu.memory_space<vmem>>, vector<9x256xf32>
    %12 = vector.broadcast %10 : vector<1x256xf32> to vector<9x256xf32>
    %13 = arith.mulf %12, %11 : vector<9x256xf32>
    %cst_10 = arith.constant 2.500000e-01 : f32
    %14 = vector.broadcast %cst_10 : f32 to vector<9x256xf32>
    %15 = arith.mulf %13, %14 : vector<9x256xf32>
    %16 = arith.mulf %8, %15 : vector<9x256xf32>
    %c0_11 = arith.constant 0 : index
    %c0_12 = arith.constant 0 : index
    %c0_13 = arith.constant 0 : index
    %c0_14 = arith.constant 0 : index
    %17 = vector.load %arg6[%c0_11, %c0_12, %c0_13, %c0_14] : memref<1x1x9x256xf32, #tpu.memory_space<vmem>>, vector<1x1x9x256xf32>
    %18 = vector.shape_cast %17 : vector<1x1x9x256xf32> to vector<9x256xf32>
    %19 = vector.shape_cast %16 : vector<9x256xf32> to vector<1x1x9x256xf32>
    tpu.vector_store %arg6[%c0_11, %c0_12, %c0_13, %c0_14], %19 {strides = array<i32>} : memref<1x1x9x256xf32, #tpu.memory_space<vmem>>, vector<1x1x9x256xf32>,
    %c0_15 = arith.constant 0 : index
    %c0_16 = arith.constant 0 : index
    %20 = vector.load %arg7[%c0_15, %c0_16] : memref<4x256xf32, #tpu.memory_space<vmem>>, vector<4x256xf32>
    %21 = vector.extract_strided_slice %20 {offsets = [0, 7], sizes = [4, 249], strides = [1, 1]} : vector<4x256xf32> to vector<4x249xf32>
    %c0_17 = arith.constant 0 : index
    %c0_18 = arith.constant 0 : index
    %22 = vector.load %arg7[%c0_17, %c0_18] : memref<4x256xf32, #tpu.memory_space<vmem>>, vector<4x249xf32>
    tpu.vector_store %arg7[%c0_17, %c0_18], %21 {strides = array<i32>} : memref<4x256xf32, #tpu.memory_space<vmem>>, vector<4x249xf32>,
    %23 = vector.extract_strided_slice %20 {offsets = [0, 0], sizes = [4, 7], strides = [1, 1]} : vector<4x256xf32> to vector<4x7xf32>
    %c0_19 = arith.constant 0 : index
    %c249 = arith.constant 249 : index
    %24 = vector.load %arg7[%c0_19, %c249] : memref<4x256xf32, #tpu.memory_space<vmem>>, vector<4x7xf32>
    tpu.vector_store %arg7[%c0_19, %c249], %23 {strides = array<i32>} : memref<4x256xf32, #tpu.memory_space<vmem>>, vector<4x7xf32>,
    return
  }
  func.func @transform_0(%arg0: i32, %arg1: i32) -> (i32, i32, i32) {
    %c0_i32 = arith.constant 0 : i32
    %c0_i32_0 = arith.constant 0 : i32
    %c0_i32_1 = arith.constant 0 : i32
    return %arg0, %c0_i32, %c0_i32_0 : i32, i32, i32
  }
  func.func @transform_1(%arg0: i32, %arg1: i32) -> (i32, i32, i32) {
    %c0_i32 = arith.constant 0 : i32
    %c0_i32_0 = arith.constant 0 : i32
    %c0_i32_1 = arith.constant 0 : i32
    return %arg0, %c0_i32, %c0_i32_0 : i32, i32, i32
  }
  func.func @transform_2(%arg0: i32, %arg1: i32) -> (i32, i32, i32) {
    %c0_i32 = arith.constant 0 : i32
    %c0_i32_0 = arith.constant 0 : i32
    %c0_i32_1 = arith.constant 0 : i32
    return %arg1, %c0_i32, %c0_i32_0 : i32, i32, i32
  }
  func.func @transform_3(%arg0: i32, %arg1: i32) -> (i32, i32) {
    %c0_i32 = arith.constant 0 : i32
    %c0_i32_0 = arith.constant 0 : i32
    %c0_i32_1 = arith.constant 0 : i32
    return %c0_i32, %c0_i32_0 : i32, i32
  }
  func.func @transform_4(%arg0: i32, %arg1: i32) -> (i32, i32, i32, i32) {
    %c0_i32 = arith.constant 0 : i32
    %c0_i32_0 = arith.constant 0 : i32
    %c0_i32_1 = arith.constant 0 : i32
    return %arg0, %arg1, %c0_i32, %c0_i32_0 : i32, i32, i32, i32
  }
}

</mosaic_0001>

<llo_original>
// kernel: tpu_custom_call.1
$region0: #{tpu_custom_call.1}
  #allocation0 [shape = 'u32[]', space=smem, size = 0x4, offset = 0x4, fixed_abs, tag = 'smem constant byte address 0x4 - core index']
  #allocation1 [shape = 'u32[144,128]{1,0:T(1,128)}', space=vmem, size = 0x12000, scoped, tag = 'internal scratch']
  #allocation2 [shape = 'f32[4,256]{1,0:T(4,128)}', space=vmem, size = 0x1000, scoped, tag = 'scratch operand']
  %s0 = inlined_call_operand.hbm [shape: f32[2,4,256], index: 0, kind: input, shape index: {}]
  %s1 = inlined_call_operand.hbm [shape: f32[2,4,256], index: 1, kind: input, shape index: {}]
  %s2 = inlined_call_operand.hbm [shape: f32[9,1,256], index: 2, kind: input, shape index: {}]
  %s3 = inlined_call_operand.hbm [shape: f32[9,256], index: 3, kind: input, shape index: {}]
  %s4 = inlined_call_operand.vmem [shape: f32[2,9,9,256], index: 4, kind: output, shape index: {}]
  %s5 = sld [smem:[#allocation0]]
  $region76: #{tpu_custom_call.1} parent=0
    _
  %s7 = ssub.s32 1, %s5
  %s8 = scalar_select 0, %s7, %s5
  $region1: #{tpu_custom_call.1} parent=0
    #allocation3 [shape = 'u8[8192]{0}', space=vmem, size = 0x2000, scoped, tag = 'input window, operand 0']
    #allocation4 [shape = 's32[2]{0}', space=sflag, size = 0x8, scoped, tag = 'scoped memory for tpu_custom_call.1']
    #allocation5 [shape = 'u8[8192]{0}', space=vmem, size = 0x2000, scoped, tag = 'input window, operand 1']
    #allocation6 [shape = 's32[2]{0}', space=sflag, size = 0x8, scoped, tag = 'scoped memory for tpu_custom_call.1']
    #allocation7 [shape = 'u8[2048]{0}', space=vmem, size = 0x800, scoped, tag = 'input window, operand 2']
    #allocation8 [shape = 'u8[16384]{0}', space=vmem, size = 0x4000, scoped, tag = 'input window, operand 3, single buffered']
    #allocation9 [shape = 's32[1]{0}', space=sflag, size = 0x4, scoped, tag = 'scoped memory for tpu_custom_call.1']
    %9 = vsyncpa [#allocation4], 0
    %s10 = scalar_lea.sflag [#allocation4], 1
    %11 = vsyncpa %s10, 0
    %12 = vsyncpa [#allocation6], 0
    %s13 = scalar_lea.sflag [#allocation6], 1
    %14 = vsyncpa %s13, 0
    %15 = vsyncpa [#allocation9], 0
    loop: start=0, step=1, limit=20
    $region2: #{tpu_custom_call.1} parent=1 // loop_pre_header
      _
    $region3: #{tpu_custom_call.1} parent=1 // loop_header
      %s17 = sphi 0, %s21
      %p18 = scmp.ge.s32.totalorder %s17, 20
      %s24 = sphi 0, %s36
      %s25 = sphi 0, %s32
      %s26 = sphi 0, %s24
      %s27 = sphi 0, %s25
      %s28 = sphi 0, %s26
      %s29 = sphi 0, %s27
      %s39 = sphi 0, %s41
      %s42 = sphi 0, %s39
      %s43 = sphi 0, %s42
      %s59 = sphi 0, %s43
      %s65 = sphi 0, %s67
      %s68 = sphi 0, %s65
      %s69 = sphi 0, %s68
      %s85 = sphi 0, %s69
      %s91 = sphi 0, %s93
      %s94 = sphi 0, %s91
      %s95 = sphi 0, %s94
      %s111 = sphi 0, %s95
      %s115 = sphi 0, %s115
      %s117 = sphi 0, %s115
      %s118 = sphi 0, %s117
      %s132 = sphi 0, %s118
      %s140 = sphi 0, %s142
      %s143 = sphi 0, %s140
      %s144 = sphi 0, %s143
      %s160 = sphi 0, %s144
    $region4: #{tpu_custom_call.1} parent=1 // loop_header_branch
      %20 = sbr.rel (%p18) target = $region8
    $region5: #{tpu_custom_call.1} parent=1 // loop_body
      %s22 = ssub.s32 %s17, 1
      %s23 = ssub.s32 %s17, 2
      %s30 = sadd.s32 1, %s25
      %p31 = scmp.ge.s32.totalorder %s30, 9
      %s32 = scalar_select %p31, 0, %s30
      %s33 = sadd.s32 1, %s24
      %s34 = scalar_select %p31, %s33, %s24
      %p35 = scmp.ge.s32.totalorder %s34, 2
      %s36 = scalar_select %p35, 0, %s34
      %s37 = ssub.s32 %s24, %s36
      %p38 = scmp.eq.s32.totalorder %s37, 0
      %s40 = sadd.s32 %s39, 1
      %s41 = scalar_select %p38, %s39, %s40
      %p44 = pneg %p38
      %p45 = scmp.eq.s32.totalorder %s17, 17
      %p46 = por %p44, %p45
      %p47 = scmp.ne.s32.totalorder %s39, %s42
      %p48 = scmp.eq.s32.totalorder %s17, 0
      %p49 = por %p47, %p48
      %p50 = scmp.ne.s32.totalorder %s39, %s42
      %p51 = scmp.eq.s32.totalorder %s22, 17
      %p52 = por %p50, %p51
      %p53 = scmp.ne.s32.totalorder %s42, %s43
      %p54 = scmp.eq.s32.totalorder %s22, 0
      %p55 = por %p53, %p54
      %p56 = scmp.ne.s32.totalorder %s42, %s43
      %p57 = scmp.eq.s32.totalorder %s23, 17
      %p58 = por %p56, %p57
      %p60 = scmp.ne.s32.totalorder %s43, %s59
      %p61 = scmp.eq.s32.totalorder %s23, 0
      %p62 = por %p60, %p61
      %s63 = ssub.s32 %s24, %s36
      %p64 = scmp.eq.s32.totalorder %s63, 0
      %s66 = sadd.s32 %s65, 1
      %s67 = scalar_select %p64, %s65, %s66
      %p70 = pneg %p64
      %p71 = scmp.eq.s32.totalorder %s17, 17
      %p72 = por %p70, %p71
      %p73 = scmp.ne.s32.totalorder %s65, %s68
      %p74 = scmp.eq.s32.totalorder %s17, 0
      %p75 = por %p73, %p74
      %p76 = scmp.ne.s32.totalorder %s65, %s68
      %p77 = scmp.eq.s32.totalorder %s22, 17
      %p78 = por %p76, %p77
      %p79 = scmp.ne.s32.totalorder %s68, %s69
      %p80 = scmp.eq.s32.totalorder %s22, 0
      %p81 = por %p79, %p80
      %p82 = scmp.ne.s32.totalorder %s68, %s69
      %p83 = scmp.eq.s32.totalorder %s23, 17
      %p84 = por %p82, %p83
      %p86 = scmp.ne.s32.totalorder %s69, %s85
      %p87 = scmp.eq.s32.totalorder %s23, 0
      %p88 = por %p86, %p87
      %s89 = ssub.s32 %s25, %s32
      %p90 = scmp.eq.s32.totalorder %s89, 0
      %s92 = sadd.s32 %s91, 1
      %s93 = scalar_select %p90, %s91, %s92
      %p96 = pneg %p90
      %p97 = scmp.eq.s32.totalorder %s17, 17
      %p98 = por %p96, %p97
      %p99 = scmp.ne.s32.totalorder %s91, %s94
      %p100 = scmp.eq.s32.totalorder %s17, 0
      %p101 = por %p99, %p100
      %p102 = scmp.ne.s32.totalorder %s91, %s94
      %p103 = scmp.eq.s32.totalorder %s22, 17
      %p104 = por %p102, %p103
      %p105 = scmp.ne.s32.totalorder %s94, %s95
      %p106 = scmp.eq.s32.totalorder %s22, 0
      %p107 = por %p105, %p106
      %p108 = scmp.ne.s32.totalorder %s94, %s95
      %p109 = scmp.eq.s32.totalorder %s23, 17
      %p110 = por %p108, %p109
      %p112 = scmp.ne.s32.totalorder %s95, %s111
      %p113 = scmp.eq.s32.totalorder %s23, 0
      %p114 = por %p112, %p113
      %s116 = sadd.s32 %s115, 1
      %p119 = scmp.eq.s32.totalorder %s17, 17
      %p120 = scmp.ne.s32.totalorder %s115, %s117
      %p121 = scmp.eq.s32.totalorder %s17, 0
      %p122 = por %p120, %p121
      %p123 = scmp.ne.s32.totalorder %s115, %s117
      %p124 = scmp.eq.s32.totalorder %s22, 17
      %p125 = por %p123, %p124
      %p126 = scmp.ne.s32.totalorder %s117, %s118
      %p127 = scmp.eq.s32.totalorder %s22, 0
      %p128 = por %p126, %p127
      %p129 = scmp.ne.s32.totalorder %s117, %s118
      %p130 = scmp.eq.s32.totalorder %s23, 17
      %p131 = por %p129, %p130
      %p133 = scmp.ne.s32.totalorder %s118, %s132
      %p134 = scmp.eq.s32.totalorder %s23, 0
      %p135 = por %p133, %p134
      %s136 = ssub.s32 %s24, %s36
      %s137 = ssub.s32 %s25, %s32
      %s138 = sor.u32 %s136, %s137
      %p139 = scmp.eq.s32.totalorder %s138, 0
      %s141 = sadd.s32 %s140, 1
      %s142 = scalar_select %p139, %s140, %s141
      %p145 = pneg %p139
      %p146 = scmp.eq.s32.totalorder %s17, 17
      %p147 = por %p145, %p146
      %p148 = scmp.ne.s32.totalorder %s140, %s143
      %p149 = scmp.eq.s32.totalorder %s17, 0
      %p150 = por %p148, %p149
      %p151 = scmp.ne.s32.totalorder %s140, %s143
      %p152 = scmp.eq.s32.totalorder %s22, 17
      %p153 = por %p151, %p152
      %p154 = scmp.ne.s32.totalorder %s143, %s144
      %p155 = scmp.eq.s32.totalorder %s22, 0
      %p156 = por %p154, %p155
      %p157 = scmp.ne.s32.totalorder %s143, %s144
      %p158 = scmp.eq.s32.totalorder %s23, 17
      %p159 = por %p157, %p158
      %p161 = scmp.ne.s32.totalorder %s144, %s160
      %p162 = scmp.eq.s32.totalorder %s23, 0
      %p163 = por %p161, %p162
      %p164 = scmp.le.s32.totalorder 1, %s17
      %p165 = scmp.lt.s32.totalorder %s17, 19
      %p166 = pnand %p164, %p165
      %p167 = pneg %p166
      // Predicated region
      $region9: #{tpu_custom_call.1} parent=5 // pred_check
        _
      $region10: #{tpu_custom_call.1} parent=5 // pred_check_branch
        %169 = sbr.rel (%p166) target = $region12
      $region11: #{tpu_custom_call.1} parent=5 // pred_region
        %s170 = ssub.s32 %s17, 1
        // Predicated region
        $region13: #{tpu_custom_call.1} parent=11 // pred_check
          %p171 = pneg %p128
        $region14: #{tpu_custom_call.1} parent=11 // pred_check_branch
          %173 = sbr.rel (%p171) target = $region16
        $region15: #{tpu_custom_call.1} parent=11 // pred_region
          %s175 = ssub.s32 512, 512
          %176 = vsyncadd [#allocation9], %s175
          %s177 = sshll.u32 [#allocation8], 4
          %s178 = int_to_ptr.vmem [resolvable:$true] %s177
          %183 = dma.hbm_to_vmem [thread:$0]  %s3, 512, %s178, [#allocation9], 256, 256, 16
        $region16: #{tpu_custom_call.1} parent=11 // pred_fallthru
          _
      $region12: #{tpu_custom_call.1} parent=5 // pred_fallthru
        _
      %p184 = scmp.lt.s32.totalorder %s17, 18
      // Predicated region
      $region17: #{tpu_custom_call.1} parent=5 // pred_check
        %p185 = pneg %p184
      $region18: #{tpu_custom_call.1} parent=5 // pred_check_branch
        %187 = sbr.rel (%p185) target = $region20
      $region19: #{tpu_custom_call.1} parent=5 // pred_region
        // Predicated region
        $region21: #{tpu_custom_call.1} parent=19 // pred_check
          %p188 = pneg %p49
        $region22: #{tpu_custom_call.1} parent=19 // pred_check_branch
          %190 = sbr.rel (%p188) target = $region24
        $region23: #{tpu_custom_call.1} parent=19 // pred_region
          %s191 = sand.u32 %s39, 1
          %s192 = scalar_lea.sflag [#allocation4], %s191
          %s193 = sand.u32 %s39, 1
          %s194 = smul.addr %s193, 8
          %s195 = scalar_lea.vmem [#allocation3], %s194
          %s197 = ssub.s32 128, 128
          %198 = vsyncadd %s192, %s197
          %s199 = smul.addr %s24, 2
          %s200 = smul.addr %s199, 64
          %s201 = scalar_lea.hbm %s0, %s200
          %s203 = sshll.u32 %s195, 4
          %s204 = int_to_ptr.vmem [resolvable:$true] %s203
          %206 = dma.hbm_to_vmem [thread:$0]  %s201, 128, %s204, %s192
        $region24: #{tpu_custom_call.1} parent=19 // pred_fallthru
          _
        // Predicated region
        $region25: #{tpu_custom_call.1} parent=19 // pred_check
          %p207 = pneg %p75
        $region26: #{tpu_custom_call.1} parent=19 // pred_check_branch
          %209 = sbr.rel (%p207) target = $region28
        $region27: #{tpu_custom_call.1} parent=19 // pred_region
          %s210 = sand.u32 %s17, 1
          %s211 = scalar_lea.sflag [#allocation6], %s210
          %s212 = sand.u32 %s65, 1
          %s213 = smul.addr %s212, 8
          %s214 = scalar_lea.vmem [#allocation5], %s213
          %s216 = ssub.s32 128, 128
          %217 = vsyncadd %s211, %s216
          %s218 = smul.addr %s24, 2
          %s219 = smul.addr %s218, 64
          %s220 = scalar_lea.hbm %s1, %s219
          %s222 = sshll.u32 %s214, 4
          %s223 = int_to_ptr.vmem [resolvable:$true] %s222
          %225 = dma.hbm_to_vmem [thread:$0]  %s220, 128, %s223, %s211
        $region28: #{tpu_custom_call.1} parent=19 // pred_fallthru
          _
        // Predicated region
        $region29: #{tpu_custom_call.1} parent=19 // pred_check
          %p226 = pneg %p101
        $region30: #{tpu_custom_call.1} parent=19 // pred_check_branch
          %228 = sbr.rel (%p226) target = $region32
        $region31: #{tpu_custom_call.1} parent=19 // pred_region
          %s229 = sand.u32 %s17, 1
          %s230 = scalar_lea.sflag [#allocation6], %s229
          %s231 = sand.u32 %s91, 1
          %s232 = smul.addr %s231, 2
          %s233 = scalar_lea.vmem [#allocation7], %s232
          %s235 = ssub.s32 32, 32
          %236 = vsyncadd %s230, %s235
          %s237 = smul.addr %s25, 2
          %s238 = smul.addr %s237, 16
          %s239 = scalar_lea.hbm %s2, %s238
          %s241 = sshll.u32 %s233, 4
          %s242 = int_to_ptr.vmem [resolvable:$true] %s241
          %244 = dma.hbm_to_vmem [thread:$0]  %s239, 32, %s242, %s230
        $region32: #{tpu_custom_call.1} parent=19 // pred_fallthru
          _
      $region20: #{tpu_custom_call.1} parent=5 // pred_fallthru
        _
      %p245 = scmp.le.s32.totalorder 1, %s17
      %p246 = scmp.lt.s32.totalorder %s17, 19
      %p247 = pnand %p245, %p246
      %p248 = pneg %p247
      // Predicated region
      $region33: #{tpu_custom_call.1} parent=5 // pred_check
        _
      $region34: #{tpu_custom_call.1} parent=5 // pred_check_branch
        %250 = sbr.rel (%p247) target = $region36
      $region35: #{tpu_custom_call.1} parent=5 // pred_region
        %s251 = ssub.s32 %s17, 1
        %s252 = sand.u32 %s42, 1
        %s253 = scalar_lea.sflag [#allocation4], %s252
        %s254 = sand.u32 %s42, 1
        %s255 = smul.addr %s254, 8
        %s256 = scalar_lea.vmem [#allocation3], %s255
        // Predicated region
        $region37: #{tpu_custom_call.1} parent=35 // pred_check
          %p257 = pneg %p55
        $region38: #{tpu_custom_call.1} parent=35 // pred_check_branch
          %259 = sbr.rel (%p257) target = $region40
        $region39: #{tpu_custom_call.1} parent=35 // pred_region
          %260 = dma.done %s253, 128
        $region40: #{tpu_custom_call.1} parent=35 // pred_fallthru
          _
        %s261 = sand.u32 %s22, 1
        %s262 = scalar_lea.sflag [#allocation6], %s261
        %s263 = sand.u32 %s68, 1
        %s264 = smul.addr %s263, 8
        %s265 = scalar_lea.vmem [#allocation5], %s264
        // Predicated region
        $region41: #{tpu_custom_call.1} parent=35 // pred_check
          %p266 = pneg %p81
        $region42: #{tpu_custom_call.1} parent=35 // pred_check_branch
          %268 = sbr.rel (%p266) target = $region44
        $region43: #{tpu_custom_call.1} parent=35 // pred_region
          %269 = dma.done %s262, 128
        $region44: #{tpu_custom_call.1} parent=35 // pred_fallthru
          _
        %s270 = sand.u32 %s22, 1
        %s271 = scalar_lea.sflag [#allocation6], %s270
        %s272 = sand.u32 %s94, 1
        %s273 = smul.addr %s272, 2
        %s274 = scalar_lea.vmem [#allocation7], %s273
        // Predicated region
        $region45: #{tpu_custom_call.1} parent=35 // pred_check
          %p275 = pneg %p107
        $region46: #{tpu_custom_call.1} parent=35 // pred_check_branch
          %277 = sbr.rel (%p275) target = $region48
        $region47: #{tpu_custom_call.1} parent=35 // pred_region
          %278 = dma.done %s271, 32
        $region48: #{tpu_custom_call.1} parent=35 // pred_fallthru
          _
        // Predicated region
        $region49: #{tpu_custom_call.1} parent=35 // pred_check
          %p279 = pneg %p128
        $region50: #{tpu_custom_call.1} parent=35 // pred_check_branch
          %281 = sbr.rel (%p279) target = $region52
        $region51: #{tpu_custom_call.1} parent=35 // pred_region
          %282 = dma.done [#allocation9], 512
        $region52: #{tpu_custom_call.1} parent=35 // pred_fallthru
          _
        %s283 = sand.u32 %s42, 1
        %s284 = scalar_lea.sflag [#allocation4], %s283
        %s285 = sand.u32 %s42, 1
        %s286 = smul.addr %s285, 8
        %s287 = scalar_lea.vmem [#allocation3], %s286
        %p288 = pneg %p55
        %p289 = pneg %p52
        %s290 = sand.u32 %s22, 1
        %s291 = scalar_lea.sflag [#allocation6], %s290
        %s292 = sand.u32 %s68, 1
        %s293 = smul.addr %s292, 8
        %s294 = scalar_lea.vmem [#allocation5], %s293
        %p295 = pneg %p81
        %p296 = pneg %p78
        %s297 = sand.u32 %s22, 1
        %s298 = scalar_lea.sflag [#allocation6], %s297
        %s299 = sand.u32 %s94, 1
        %s300 = smul.addr %s299, 2
        %s301 = scalar_lea.vmem [#allocation7], %s300
        %p302 = pneg %p107
        %p303 = pneg %p104
        %p304 = pneg %p128
        %p305 = pneg %p125
        %p306 = pneg %p156
        %p307 = pneg %p153
        %p308 = scmp.lt.s32.totalorder %s26, 1
        %s309 = scalar_select %p308, %s26, 1
        %p310 = scmp.lt.s32.totalorder %s27, 8
        %s311 = scalar_select %p310, %s27, 8
        %s312 = smul.addr %s311, 4
        %s313 = smul.addr %s309, 36
        %s314 = sadd.s32 %s312, %s313
        %s315 = smul.addr %s314, 8
        %s316 = scalar_lea.vmem %s4, %s315
        %p317 = scmp.lt.s32.totalorder %s26, 1
        %s318 = scalar_select %p317, %s26, 1
        %p319 = scmp.lt.s32.totalorder %s27, 8
        %s320 = scalar_select %p319, %s27, 8
        %s321 = smul.addr %s320, 4
        %s322 = smul.addr %s318, 36
        %s323 = sadd.s32 %s321, %s322
        %s324 = smul.addr %s323, 8
        %s325 = scalar_lea.vmem %s4, %s324
        %p326 = scmp.eq.s32.totalorder %s27, 0
        // Predicated region
        $region53: #{tpu_custom_call.1} parent=35 // pred_check
          %p327 = pneg %p326
        $region54: #{tpu_custom_call.1} parent=35 // pred_check_branch
          %329 = sbr.rel (%p327) target = $region56
        $region55: #{tpu_custom_call.1} parent=35 // pred_region
          %v330 = vld [vmem:[%s265] sm:$0xff]
          %332 = vrot.lane.b32.xlu0 %v330, 68
          %v333 = vpop.permute.xlu0 %332
          %v334 = vrot.slane %v333, 4
          %vm336 = vcmask 551936
          %337 = vst.msk [vmem:[#allocation2] sm:$0xf] %vm336, %v334
          %vm338 = vcmask 556032
          %v339 = vsel %vm338, %v334, %v333
          %vm341 = vcmask 1044000
          %vm342 = vcmask 1047556
          %vm343 = vmor %vm342, %vm341
          %344 = vst.msk [vmem:[#allocation2] sm:$0xff] %vm343, %v339
        $region56: #{tpu_custom_call.1} parent=35 // pred_fallthru
          _
        %v345 = vld [vmem:[%s256] sm:$0xff]
        %v346 = vlaneseq
        %v347 = vshrl.u32 %v346, 7
        %v348 = vadd.s32 %v347, 8
        loop: start=0, step=1, limit=9
        $region57: #{tpu_custom_call.1} parent=35 // loop_pre_header
          _
        $region58: #{tpu_custom_call.1} parent=35 // loop_header
          %s350 = sphi 0, %s354
          %p351 = scmp.ge.s32.totalorder %s350, 9
          %v355 = vphi 0.0, %v382
          %v356 = vphi 0.0, %v383
          %v357 = vphi 0.0, %v384
          %v358 = vphi 0.0, %v385
        $region59: #{tpu_custom_call.1} parent=35 // loop_header_branch
          %353 = sbr.rel (%p351) target = $region63
        $region60: #{tpu_custom_call.1} parent=35 // loop_body
          %v359 = vld [vmem:[#allocation2] sm:$0xff]
          %v360 = vmul.f32 %v345, %v359
          %v362 = vcombine.high %v360, %v360
          %vm364 = vcmask 1043456
          %v365 = vsel %vm364, %v360, 0.0
          %v366 = vrot.slane %v365, 4
          %v367 = vadd.f32 %v365, %v366
          %v368 = vrot.slane %v367, 2
          %v369 = vadd.f32 %v367, %v368
          %v370 = vrot.slane %v369, 1
          %v371 = vadd.f32 %v369, %v370
          %v372 = vsel %vm364, %v362, 0.0
          %v373 = vrot.slane %v372, 4
          %v374 = vadd.f32 %v372, %v373
          %v375 = vrot.slane %v374, 2
          %v376 = vadd.f32 %v374, %v375
          %v377 = vrot.slane %v376, 1
          %v378 = vadd.f32 %v376, %v377
          %v379 = vstv %s350
          %vm380 = vcmp.eq.s32.totalorder %v347, %v379
          %vm381 = vcmp.eq.s32.totalorder %v348, %v379
          %v382 = vsel %vm380, %v371, %v355
          %v383 = vsel %vm380, %v378, %v356
          %v384 = vsel %vm381, %v371, %v357
          %v385 = vsel %vm381, %v378, %v358
          %387 = vrot.lane.b32.xlu0 %v359, 127
          %v388 = vpop.permute.xlu0 %387
          %v389 = vrot.slane %v388, 4
          %vm390 = vcmask 1039360
          %v391 = vsel %vm390, %v388, %v389
          %vm393 = vcmask 1039364
          %vm394 = vmor %vm393, %vm364
          %395 = vst.msk [vmem:[#allocation2] sm:$0xff] %vm394, %v391
          %vm397 = vcmask 1044472
          %398 = vst.msk [vmem:[#allocation2 + $0x4] sm:$0xf] %vm397, %v388
        $region61: #{tpu_custom_call.1} parent=35 // loop_footer
          %s354 = sadd.s32 1, %s350
        $region62: #{tpu_custom_call.1} parent=35 // loop_footer_branch
          %349 = sbr.rel target = $region58
        $region63: #{tpu_custom_call.1} parent=35 // loop_exit
          _
        %v399 = vld [vmem:[%s274] sm:$0x3]
        %v400 = vld [vmem:[#allocation8] sm:$0xff]
        %v401 = vld [vmem:[#allocation8 + $0x8] sm:$0xff]
        %v402 = vld [vmem:[#allocation8 + $0x10] sm:$0x1]
        %v403 = vld [vmem:[#allocation8 + $0x18] sm:$0x1]
        %v405 = vlaneseq
        %v406 = vshrl.u32 %v405, 7
        %v407 = vsub.s32 0, %v406
        %v408 = vrot.slane %v399, %v407
        %v409 = vlaneseq
        %v410 = vshrl.u32 %v409, 7
        %v411 = vsub.s32 1, %v410
        %v412 = vrot.slane %v399, %v411
        %v415 = vmul.f32 %v408, %v400
        %v416 = vmul.f32 %v412, %v401
        %v417 = vmul.f32 %v408, %v402
        %v418 = vmul.f32 %v412, %v403
        %v419 = vmul.f32 %v415, 0.25
        %v420 = vmul.f32 %v416, 0.25
        %v421 = vmul.f32 %v417, 0.25
        %v422 = vmul.f32 %v418, 0.25
        %v423 = vmul.f32 %v355, %v419
        %v424 = vmul.f32 %v356, %v420
        %v425 = vmul.f32 %v357, %v421
        %v426 = vmul.f32 %v358, %v422
        %427 = vst [vmem:[%s325] sm:$0xff] %v423
        %428 = vst [vmem:[%s325 + $0x8] sm:$0xff] %v424
        %429 = vst [vmem:[%s325 + $0x10] sm:$0x1] %v425
        %430 = vst [vmem:[%s325 + $0x18] sm:$0x1] %v426
        %v431 = vld [vmem:[#allocation2] sm:$0xff]
        %433 = vrot.lane.b32.xlu0 %v431, 121
        %v434 = vpop.permute.xlu0 %433
        %v435 = vrot.slane %v434, 4
        %vm436 = vcmask 990208
        %v437 = vsel %vm436, %v434, %v435
        %vm439 = vcmask 1043456
        %vm440 = vcmask 990212
        %vm441 = vmor %vm440, %vm439
        %442 = vst.msk [vmem:[#allocation2] sm:$0xff] %vm441, %v437
        %vm444 = vcmask 1044424
        %445 = vst.msk [vmem:[#allocation2 + $0x4] sm:$0xf] %vm444, %v434
        %p446 = scmp.lt.s32.totalorder %s26, 1
        %s447 = scalar_select %p446, %s26, 1
        %p448 = scmp.lt.s32.totalorder %s27, 8
        %s449 = scalar_select %p448, %s27, 8
        %s450 = smul.addr %s449, 4
        %s451 = smul.addr %s447, 36
        %s452 = sadd.s32 %s450, %s451
        %s453 = smul.addr %s452, 8
        %s454 = scalar_lea.vmem %s4, %s453
        // Predicated region
        $region64: #{tpu_custom_call.1} parent=35 // pred_check
          %p455 = pneg %p153
        $region65: #{tpu_custom_call.1} parent=35 // pred_check_branch
          %457 = sbr.rel (%p455) target = $region67
        $region66: #{tpu_custom_call.1} parent=35 // pred_region
          _
        $region67: #{tpu_custom_call.1} parent=35 // pred_fallthru
          _
      $region36: #{tpu_custom_call.1} parent=5 // pred_fallthru
        _
      %p458 = scmp.le.s32.totalorder 2, %s17
      // Predicated region
      $region68: #{tpu_custom_call.1} parent=5 // pred_check
        %p459 = pneg %p458
      $region69: #{tpu_custom_call.1} parent=5 // pred_check_branch
        %461 = sbr.rel (%p459) target = $region71
      $region70: #{tpu_custom_call.1} parent=5 // pred_region
        %s462 = ssub.s32 %s17, 2
        // Predicated region
        $region72: #{tpu_custom_call.1} parent=70 // pred_check
          %p463 = pneg %p159
        $region73: #{tpu_custom_call.1} parent=70 // pred_check_branch
          %465 = sbr.rel (%p463) target = $region75
        $region74: #{tpu_custom_call.1} parent=70 // pred_region
          %p466 = scmp.lt.s32.totalorder %s28, 1
          %s467 = scalar_select %p466, %s28, 1
          %p468 = scmp.lt.s32.totalorder %s29, 8
          %s469 = scalar_select %p468, %s29, 8
          %s470 = smul.addr %s469, 4
          %s471 = smul.addr %s467, 36
          %s472 = sadd.s32 %s470, %s471
          %s473 = smul.addr %s472, 8
          %s474 = scalar_lea.vmem %s4, %s473
        $region75: #{tpu_custom_call.1} parent=70 // pred_fallthru
          _
      $region71: #{tpu_custom_call.1} parent=5 // pred_fallthru
        _
    $region6: #{tpu_custom_call.1} parent=1 // loop_footer
      %s21 = sadd.s32 1, %s17
    $region7: #{tpu_custom_call.1} parent=1 // loop_footer_branch
      %16 = sbr.rel target = $region3
    $region8: #{tpu_custom_call.1} parent=1 // loop_exit
      _
    %475 = vsyncpa [#allocation4], 1
    %s476 = scalar_lea.sflag [#allocation4], 1
    %477 = vsyncpa %s476, 1
    %478 = vsyncpa [#allocation6], 1
    %s479 = scalar_lea.sflag [#allocation6], 1
    %480 = vsyncpa %s479, 1
    %481 = vsyncpa [#allocation9], 1

</llo_original>
